<compile_context>
chip_gen: v7x
topology: tpu7x:2x2x1
jax: 0.10.0
libtpu: 0.0.40
codegen_flags: <defaults>
</compile_context>

<pallas_src>
import functools
import math

import jax
import jax.numpy as jnp
from jax.experimental import pallas as pl
from jax.experimental.pallas import tpu as pltpu


def _round_up(x: int, m: int) -> int:
    return ((x + m - 1) // m) * m


def _fused_mlp_kernel(*refs, n_layers: int):
    """Fused MLP on one batch tile: chain of (x @ W + b) with ReLU between layers.

    refs = (x_ref, w0_ref, b0_ref, w1_ref, b1_ref, ..., o_ref)
    All weights/biases are full-array VMEM-resident blocks; intermediates stay
    in vregs/VMEM (no HBM round-trips between layers).
    """
    x_ref = refs[0]
    o_ref = refs[-1]

    h = x_ref[...]
    for i in range(n_layers):
        w_ref = refs[1 + 2 * i]
        b_ref = refs[2 + 2 * i]
        h = jnp.dot(h, w_ref[...], preferred_element_type=jnp.float32)
        h = h + b_ref[...]  # bias is (1, Fout_pad): broadcasts over the batch tile
        if i != n_layers - 1:
            h = jnp.maximum(h, 0.0)  # ReLU between all but the last layer
    o_ref[...] = h.astype(o_ref.dtype)


def prepare_params(params):
    """One-time param prep (run ONCE, outside the forward path).

    Pads every layer's output dim (and the next layer's matching input dim) up to a
    multiple of 128 with zeros, so all in-kernel activations/stores are lane-dense.
    The first layer's input dim (Fin) is left as-is: it equals the full array dim,
    so the x BlockSpec is still legal and x needs no per-call padding.

    Returns (padded_params, orig_fout).
    """
    padded = []
    prev_out_pad = params[0][0].shape[0]  # Fin, unpadded
    for (w, b) in params:
        in_dim, out_dim = w.shape
        out_pad = _round_up(out_dim, 128)
        w_p = jnp.zeros((prev_out_pad, out_pad), w.dtype).at[:in_dim, :out_dim].set(w)
        b_p = jnp.zeros((1, out_pad), b.dtype).at[:, :out_dim].set(b)
        padded.append((w_p, b_p))
        prev_out_pad = out_pad
    return padded, params[-1][0].shape[1]


def fused_mlp_forward(x, padded_params, orig_fout):
    """Matches CustomeModel.forward: flatten to (B, -1), Linear layers with ReLU
    between all but the last, fused into a single pallas_call.

    x: (B, ...) -> flattened to (B, Fin)
    padded_params: output of prepare_params (lane-padded, f32).
    Returns (B, orig_fout) f32.
    """
    x = x.reshape(x.shape[0], -1)
    B, Fin = x.shape
    n_layers = len(padded_params)
    assert n_layers >= 1
    assert padded_params[0][0].shape[0] == Fin, (padded_params[0][0].shape, Fin)

    Fout_pad = padded_params[-1][0].shape[1]

    # Batch tile: 256 rows fill the 2x256x256 MXU on v6e/v7x and amortize the
    # ~0.35us per-grid-step overhead; (256,128) f32 intermediate = 32 vregs (safe).
    bm = min(256, _round_up(B, 8))
    grid = (pl.cdiv(B, bm),)  # ragged last block allowed; extra rows sliced off below

    in_specs = [pl.BlockSpec((bm, Fin), lambda i: (i, 0))]
    flat_inputs = [x]
    flops = 0
    bytes_accessed = x.size * x.dtype.itemsize
    for (w, b) in padded_params:
        # Full-array blocks with constant index_map -> weights stay VMEM-resident
        # across all batch tiles.
        in_specs.append(pl.BlockSpec(w.shape, lambda i: (0, 0)))
        in_specs.append(pl.BlockSpec(b.shape, lambda i: (0, 0)))
        flat_inputs.append(w)
        flat_inputs.append(b)
        flops += 2 * B * w.shape[0] * w.shape[1]
        bytes_accessed += w.size * w.dtype.itemsize + b.size * b.dtype.itemsize
    bytes_accessed += B * Fout_pad * 4

    out = pl.pallas_call(
        functools.partial(_fused_mlp_kernel, n_layers=n_layers),
        out_shape=jax.ShapeDtypeStruct((B, Fout_pad), jnp.float32),
        grid=grid,
        in_specs=in_specs,
        out_specs=pl.BlockSpec((bm, Fout_pad), lambda i: (i, 0)),
        compiler_params=pltpu.CompilerParams(
            dimension_semantics=("parallel",),  # batch tiles independent (megacore on v7x)
        ),
        cost_estimate=pl.CostEstimate(
            flops=flops, transcendentals=0, bytes_accessed=bytes_accessed
        ),
    )(*flat_inputs)

    # Keep the slice: padded lanes are exact zeros but the downstream contract is
    # (B, num_targets); ragged-batch garbage rows (if any) are also dropped here.
    return out[:, :orig_fout]


# jit fuses the reshape + pallas_call + final slice into one XLA program.
fused_mlp_forward_jit = jax.jit(fused_mlp_forward, static_argnums=(2,))


def init_params(layer_list, key):
    """Deterministic PyTorch-style init: U(-1/sqrt(fan_in), 1/sqrt(fan_in))."""
    params = []
    for n in range(len(layer_list) - 1):
        fan_in, fan_out = layer_list[n], layer_list[n + 1]
        key, kw, kb = jax.random.split(key, 3)
        bound = 1.0 / math.sqrt(fan_in)
        # PyTorch stores weight as (out, in); we keep (in, out) for the kernel.
        w = jax.random.uniform(kw, (fan_in, fan_out), jnp.float32, -bound, bound)
        b = jax.random.uniform(kb, (1, fan_out), jnp.float32, -bound, bound)
        params.append((w, b))
    return params


def reference_forward(x, params):
    """Pure-JAX reference of CustomeModel.forward for correctness checking."""
    x = x.reshape(x.shape[0], -1)
    n_layers = len(params)
    for i, (w, b) in enumerate(params):
        x = x @ w + b
        if i != n_layers - 1:
            x = jnp.maximum(x, 0.0)
    return x


if __name__ == "__main__":
    # layer_list = [32, 64, 128, 16]  (num_inputs=32, num_targets=16)
    layer_list = [32, 64, 128, 16]
    batch = 8

    key = jax.random.PRNGKey(0)
    key, kx = jax.random.split(key)
    # Input (8, 4, 8) flattens to (8, 32), matching num_inputs of the first layer.
    x = jax.random.normal(kx, (batch, 4, 8), dtype=jnp.float32)

    params = init_params(layer_list, key)

    # One-time param preparation (padding) — not part of the per-call forward.
    padded_params, orig_fout = prepare_params(params)
    padded_params = jax.block_until_ready(padded_params)

    out = fused_mlp_forward_jit(x, padded_params, orig_fout)
    out = jax.block_until_ready(out)

    assert out.shape == (batch, layer_list[-1]), out.shape
    assert out.dtype == jnp.float32

    ref = reference_forward(x, params)
    assert jnp.allclose(out, ref, atol=1e-5, rtol=1e-5), float(jnp.max(jnp.abs(out - ref)))

    print("KERNEL_OK")
</pallas_src>

<mosaic_0001>
module attributes {stable_mosaic.version = 11 : i64} {
  func.func @_fused_mlp_kernel(%arg0: i32, %arg1: memref<8x32xf32, #tpu.memory_space<vmem>>, %arg2: memref<32x128xf32, #tpu.memory_space<vmem>>, %arg3: memref<1x128xf32, #tpu.memory_space<vmem>>, %arg4: memref<128x128xf32, #tpu.memory_space<vmem>>, %arg5: memref<1x128xf32, #tpu.memory_space<vmem>>, %arg6: memref<128x128xf32, #tpu.memory_space<vmem>>, %arg7: memref<1x128xf32, #tpu.memory_space<vmem>>, %arg8: memref<8x128xf32, #tpu.memory_space<vmem>>) attributes {dimension_semantics = [#tpu.dimension_semantics<parallel>], iteration_bounds = array<i64: 1>, scalar_prefetch = 0 : i64, scratch_operands = 0 : i64, tpu.core_type = #tpu.core_type<tc>, window_params = [{transform_indices = @transform_0, window_bounds = array<i64: 8, 32>}, {pipeline_mode = #tpu.pipeline_mode<synchronous>, transform_indices = @transform_1, window_bounds = array<i64: 32, 128>}, {pipeline_mode = #tpu.pipeline_mode<synchronous>, transform_indices = @transform_2, window_bounds = array<i64: 1, 128>}, {pipeline_mode = #tpu.pipeline_mode<synchronous>, transform_indices = @transform_3, window_bounds = array<i64: 128, 128>}, {pipeline_mode = #tpu.pipeline_mode<synchronous>, transform_indices = @transform_4, window_bounds = array<i64: 1, 128>}, {pipeline_mode = #tpu.pipeline_mode<synchronous>, transform_indices = @transform_5, window_bounds = array<i64: 128, 128>}, {pipeline_mode = #tpu.pipeline_mode<synchronous>, transform_indices = @transform_6, window_bounds = array<i64: 1, 128>}, {transform_indices = @transform_7, window_bounds = array<i64: 8, 128>}]} {
    %c0 = arith.constant 0 : index
    %c0_0 = arith.constant 0 : index
    %0 = vector.load %arg1[%c0, %c0_0] : memref<8x32xf32, #tpu.memory_space<vmem>>, vector<8x32xf32>
    %c0_1 = arith.constant 0 : index
    %c0_2 = arith.constant 0 : index
    %1 = vector.load %arg2[%c0_1, %c0_2] : memref<32x128xf32, #tpu.memory_space<vmem>>, vector<32x128xf32>
    %cst = arith.constant dense<0.000000e+00> : vector<8x128xf32>
    %2 = tpu.matmul %0, %1, %cst {dimension_numbers = #tpu.dot_dimension_numbers<[1], [0], [0], [1], [0, 0, 1, 1], [], []>} : vector<8x32xf32>, vector<32x128xf32>, vector<8x128xf32> -> vector<8x128xf32>
    %c0_3 = arith.constant 0 : index
    %c0_4 = arith.constant 0 : index
    %3 = vector.load %arg3[%c0_3, %c0_4] : memref<1x128xf32, #tpu.memory_space<vmem>>, vector<1x128xf32>
    %4 = vector.broadcast %3 : vector<1x128xf32> to vector<8x128xf32>
    %5 = arith.addf %2, %4 : vector<8x128xf32>
    %cst_5 = arith.constant 0.000000e+00 : f32
    %6 = vector.broadcast %cst_5 : f32 to vector<8x128xf32>
    %7 = arith.maximumf %5, %6 : vector<8x128xf32>
    %c0_6 = arith.constant 0 : index
    %c0_7 = arith.constant 0 : index
    %8 = vector.load %arg4[%c0_6, %c0_7] : memref<128x128xf32, #tpu.memory_space<vmem>>, vector<128x128xf32>
    %cst_8 = arith.constant dense<0.000000e+00> : vector<8x128xf32>
    %9 = tpu.matmul %7, %8, %cst_8 {dimension_numbers = #tpu.dot_dimension_numbers<[1], [0], [0], [1], [0, 0, 1, 1], [], []>} : vector<8x128xf32>, vector<128x128xf32>, vector<8x128xf32> -> vector<8x128xf32>
    %c0_9 = arith.constant 0 : index
    %c0_10 = arith.constant 0 : index
    %10 = vector.load %arg5[%c0_9, %c0_10] : memref<1x128xf32, #tpu.memory_space<vmem>>, vector<1x128xf32>
    %11 = vector.broadcast %10 : vector<1x128xf32> to vector<8x128xf32>
    %12 = arith.addf %9, %11 : vector<8x128xf32>
    %cst_11 = arith.constant 0.000000e+00 : f32
    %13 = vector.broadcast %cst_11 : f32 to vector<8x128xf32>
    %14 = arith.maximumf %12, %13 : vector<8x128xf32>
    %c0_12 = arith.constant 0 : index
    %c0_13 = arith.constant 0 : index
    %15 = vector.load %arg6[%c0_12, %c0_13] : memref<128x128xf32, #tpu.memory_space<vmem>>, vector<128x128xf32>
    %cst_14 = arith.constant dense<0.000000e+00> : vector<8x128xf32>
    %16 = tpu.matmul %14, %15, %cst_14 {dimension_numbers = #tpu.dot_dimension_numbers<[1], [0], [0], [1], [0, 0, 1, 1], [], []>} : vector<8x128xf32>, vector<128x128xf32>, vector<8x128xf32> -> vector<8x128xf32>
    %c0_15 = arith.constant 0 : index
    %c0_16 = arith.constant 0 : index
    %17 = vector.load %arg7[%c0_15, %c0_16] : memref<1x128xf32, #tpu.memory_space<vmem>>, vector<1x128xf32>
    %18 = vector.broadcast %17 : vector<1x128xf32> to vector<8x128xf32>
    %19 = arith.addf %16, %18 : vector<8x128xf32>
    %c0_17 = arith.constant 0 : index
    %c0_18 = arith.constant 0 : index
    %20 = vector.load %arg8[%c0_17, %c0_18] : memref<8x128xf32, #tpu.memory_space<vmem>>, vector<8x128xf32>
    tpu.vector_store %arg8[%c0_17, %c0_18], %19 {strides = array<i32>} : memref<8x128xf32, #tpu.memory_space<vmem>>, vector<8x128xf32>,
    return
  }
  func.func @transform_0(%arg0: i32) -> (i32, i32) {
    %c0_i32 = arith.constant 0 : i32
    %c0_i32_0 = arith.constant 0 : i32
    return %arg0, %c0_i32 : i32, i32
  }
  func.func @transform_1(%arg0: i32) -> (i32, i32) {
    %c0_i32 = arith.constant 0 : i32
    %c0_i32_0 = arith.constant 0 : i32
    %c0_i32_1 = arith.constant 0 : i32
    return %c0_i32, %c0_i32_0 : i32, i32
  }
  func.func @transform_2(%arg0: i32) -> (i32, i32) {
    %c0_i32 = arith.constant 0 : i32
    %c0_i32_0 = arith.constant 0 : i32
    %c0_i32_1 = arith.constant 0 : i32
    return %c0_i32, %c0_i32_0 : i32, i32
  }
  func.func @transform_3(%arg0: i32) -> (i32, i32) {
    %c0_i32 = arith.constant 0 : i32
    %c0_i32_0 = arith.constant 0 : i32
    %c0_i32_1 = arith.constant 0 : i32
    return %c0_i32, %c0_i32_0 : i32, i32
  }
  func.func @transform_4(%arg0: i32) -> (i32, i32) {
    %c0_i32 = arith.constant 0 : i32
    %c0_i32_0 = arith.constant 0 : i32
    %c0_i32_1 = arith.constant 0 : i32
    return %c0_i32, %c0_i32_0 : i32, i32
  }
  func.func @transform_5(%arg0: i32) -> (i32, i32) {
    %c0_i32 = arith.constant 0 : i32
    %c0_i32_0 = arith.constant 0 : i32
    %c0_i32_1 = arith.constant 0 : i32
    return %c0_i32, %c0_i32_0 : i32, i32
  }
  func.func @transform_6(%arg0: i32) -> (i32, i32) {
    %c0_i32 = arith.constant 0 : i32
    %c0_i32_0 = arith.constant 0 : i32
    %c0_i32_1 = arith.constant 0 : i32
    return %c0_i32, %c0_i32_0 : i32, i32
  }
  func.func @transform_7(%arg0: i32) -> (i32, i32) {
    %c0_i32 = arith.constant 0 : i32
    %c0_i32_0 = arith.constant 0 : i32
    return %arg0, %c0_i32 : i32, i32
  }
}

</mosaic_0001>

<llo_original>
// kernel: fused_mlp_forward.1
$region0: #{fused_mlp_forward.1}
  #allocation0 [shape = 'u32[]', space=smem, size = 0x4, offset = 0x4, fixed_abs, tag = 'smem constant byte address 0x4 - core index']
  #allocation1 [shape = 'u32[144,128]{1,0:T(1,128)}', space=vmem, size = 0x12000, scoped, tag = 'internal scratch']
  %s0 = inlined_call_operand.vmem [shape: f32[8,32], index: 0, kind: input, shape index: {}]
  %s1 = inlined_call_operand.vmem [shape: f32[32,128], index: 1, kind: input, shape index: {}]
  %s2 = inlined_call_operand.vmem [shape: f32[1,128], index: 2, kind: input, shape index: {}]
  %s3 = inlined_call_operand.hbm [shape: f32[128,128], index: 3, kind: input, shape index: {}]
  %s4 = inlined_call_operand.vmem [shape: f32[1,128], index: 4, kind: input, shape index: {}]
  %s5 = inlined_call_operand.hbm [shape: f32[128,128], index: 5, kind: input, shape index: {}]
  %s6 = inlined_call_operand.vmem [shape: f32[1,128], index: 6, kind: input, shape index: {}]
  %s7 = inlined_call_operand.hbm [shape: f32[8,128], index: 7, kind: output, shape index: {}]
  %s8 = sld [smem:[#allocation0]]
  $region46: #{fused_mlp_forward.1} parent=0
    _
  %s10 = ssub.s32 1, %s8
  %s11 = scalar_select 0, %s10, %s8
  $region1: #{fused_mlp_forward.1} parent=0
    #allocation2 [shape = 'u8[65536]{0}', space=vmem, size = 0x10000, scoped, tag = 'input window, operand 3, single buffered']
    #allocation3 [shape = 's32[1]{0}', space=sflag, size = 0x4, scoped, tag = 'scoped memory for fused_mlp_forward.1']
    #allocation4 [shape = 's32[1]{0}', space=sflag, size = 0x4, scoped, tag = 'scoped memory for fused_mlp_forward.1']
    #allocation5 [shape = 'u8[65536]{0}', space=vmem, size = 0x10000, scoped, tag = 'input window, operand 5, single buffered']
    #allocation6 [shape = 's32[1]{0}', space=sflag, size = 0x4, scoped, tag = 'scoped memory for fused_mlp_forward.1']
    #allocation7 [shape = 'u8[4096]{0}', space=vmem, size = 0x1000, scoped, tag = 'output window, operand 0, single buffered']
    %12 = vsyncpa [#allocation3], 0
    %13 = vsyncpa [#allocation6], 0
    %14 = vsyncpa [#allocation4], 0
    // Predicated region
    $region2: #{fused_mlp_forward.1} parent=1 // pred_check
      _
    $region3: #{fused_mlp_forward.1} parent=1 // pred_check_branch
      %16 = sbr.rel (0) target = $region5
    $region4: #{fused_mlp_forward.1} parent=1 // pred_region
      _
    $region5: #{fused_mlp_forward.1} parent=1 // pred_fallthru
      _
    // Predicated region
    $region6: #{fused_mlp_forward.1} parent=1 // pred_check
      _
    $region7: #{fused_mlp_forward.1} parent=1 // pred_check_branch
      %18 = sbr.rel (0) target = $region9
    $region8: #{fused_mlp_forward.1} parent=1 // pred_region
      _
    $region9: #{fused_mlp_forward.1} parent=1 // pred_fallthru
      _
    // Predicated region
    $region10: #{fused_mlp_forward.1} parent=1 // pred_check
      _
    $region11: #{fused_mlp_forward.1} parent=1 // pred_check_branch
      %20 = sbr.rel (0) target = $region13
    $region12: #{fused_mlp_forward.1} parent=1 // pred_region
      _
    $region13: #{fused_mlp_forward.1} parent=1 // pred_fallthru
      _
    // Predicated region
    $region14: #{fused_mlp_forward.1} parent=1 // pred_check
      _
    $region15: #{fused_mlp_forward.1} parent=1 // pred_check_branch
      %22 = sbr.rel (0) target = $region17
    $region16: #{fused_mlp_forward.1} parent=1 // pred_region
      %s24 = ssub.s32 2048, 2048
      %25 = vsyncadd [#allocation3], %s24
      %s26 = sshll.u32 [#allocation2], 4
      %s27 = int_to_ptr.vmem [resolvable:$true] %s26
      %32 = dma.hbm_to_vmem [thread:$0]  %s3, 2048, %s27, [#allocation3], 128, 128, 8
    $region17: #{fused_mlp_forward.1} parent=1 // pred_fallthru
      _
    // Predicated region
    $region18: #{fused_mlp_forward.1} parent=1 // pred_check
      _
    $region19: #{fused_mlp_forward.1} parent=1 // pred_check_branch
      %34 = sbr.rel (0) target = $region21
    $region20: #{fused_mlp_forward.1} parent=1 // pred_region
      _
    $region21: #{fused_mlp_forward.1} parent=1 // pred_fallthru
      _
    // Predicated region
    $region22: #{fused_mlp_forward.1} parent=1 // pred_check
      _
    $region23: #{fused_mlp_forward.1} parent=1 // pred_check_branch
      %36 = sbr.rel (0) target = $region25
    $region24: #{fused_mlp_forward.1} parent=1 // pred_region
      %s38 = ssub.s32 2048, 2048
      %39 = vsyncadd [#allocation6], %s38
      %s40 = sshll.u32 [#allocation5], 4
      %s41 = int_to_ptr.vmem [resolvable:$true] %s40
      %46 = dma.hbm_to_vmem [thread:$0]  %s5, 2048, %s41, [#allocation6], 128, 128, 8
    $region25: #{fused_mlp_forward.1} parent=1 // pred_fallthru
      _
    // Predicated region
    $region26: #{fused_mlp_forward.1} parent=1 // pred_check
      _
    $region27: #{fused_mlp_forward.1} parent=1 // pred_check_branch
      %48 = sbr.rel (0) target = $region29
    $region28: #{fused_mlp_forward.1} parent=1 // pred_region
      _
    $region29: #{fused_mlp_forward.1} parent=1 // pred_fallthru
      _
    // Predicated region
    $region30: #{fused_mlp_forward.1} parent=1 // pred_check
      _
    $region31: #{fused_mlp_forward.1} parent=1 // pred_check_branch
      %50 = sbr.rel (0) target = $region33
    $region32: #{fused_mlp_forward.1} parent=1 // pred_region
      %51 = dma.done [#allocation3], 2048
    $region33: #{fused_mlp_forward.1} parent=1 // pred_fallthru
      _
    // Predicated region
    $region34: #{fused_mlp_forward.1} parent=1 // pred_check
      _
    $region35: #{fused_mlp_forward.1} parent=1 // pred_check_branch
      %53 = sbr.rel (0) target = $region37
    $region36: #{fused_mlp_forward.1} parent=1 // pred_region
      %54 = dma.done [#allocation6], 2048
    $region37: #{fused_mlp_forward.1} parent=1 // pred_fallthru
      _
    %v55 = vld [vmem:[%s0] sm:$0xff]
    %v56 = vld [vmem:[%s1] sm:$0xff]
    %v57 = vld [vmem:[%s1 + $0x8] sm:$0xff]
    %v58 = vld [vmem:[%s1 + $0x10] sm:$0xff]
    %v59 = vld [vmem:[%s1 + $0x18] sm:$0xff]
    %v60 = vld [vmem:[%s2] sm:$0x1]
    %v62 = vlaneseq
    %v63 = vshrl.u32 %v62, 7
    %v64 = vsub.s32 0, %v63
    %v65 = vrot.slane %v60, %v64
    %vm67 = vcmask 261120
    %v69 = vsel %vm67, %v55, 0
    %71 = vmatprep.subr.mxu0 0.0
    %72 = vmatpush1.msra.mxu0 %v56
    %73 = vmatprep.subr.mxu0 0.0
    %74 = vmatpush1.msra.mxu0 %v57
    %75 = vmatprep.subr.mxu0 0.0
    %76 = vmatpush1.msra.mxu0 %v58
    %77 = vmatprep.subr.mxu0 0.0
    %78 = vmatpush1.msra.mxu0 %v59
    %79 = vmatprep.subr.mxu0 0.0
    %80 = vmatpush1.msra.mxu0 0.0
    %81 = vmatprep.subr.mxu0 0.0
    %82 = vmatpush1.msra.mxu0 0.0
    %83 = vmatprep.subr.mxu0 0.0
    %84 = vmatpush1.msra.mxu0 0.0
    %85 = vmatprep.subr.mxu0 0.0
    %86 = vmatpush1.msra.mxu0 0.0
    %87 = vmatprep.subr.mxu0 0.0
    %88 = vmatpush1.msra.mxu0 0.0
    %89 = vmatprep.subr.mxu0 0.0
    %90 = vmatpush1.msra.mxu0 0.0
    %91 = vmatprep.subr.mxu0 0.0
    %92 = vmatpush1.msra.mxu0 0.0
    %93 = vmatprep.subr.mxu0 0.0
    %94 = vmatpush1.msra.mxu0 0.0
    %95 = vmatprep.subr.mxu0 0.0
    %96 = vmatpush1.msra.mxu0 0.0
    %97 = vmatprep.subr.mxu0 0.0
    %98 = vmatpush1.msra.mxu0 0.0
    %99 = vmatprep.subr.mxu0 0.0
    %100 = vmatpush1.msra.mxu0 0.0
    %101 = vmatprep.subr.mxu0 0.0
    %102 = vmatpush1.msra.mxu0 0.0
    %103 = vmatprep.subr.mxu0 0.0
    %104 = vmatpush1.msra.mxu0 0.0
    %105 = vmatprep.subr.mxu0 0.0
    %106 = vmatpush1.msra.mxu0 0.0
    %107 = vmatprep.subr.mxu0 0.0
    %108 = vmatpush1.msra.mxu0 0.0
    %109 = vmatprep.subr.mxu0 0.0
    %110 = vmatpush1.msra.mxu0 0.0
    %111 = vmatprep.subr.mxu0 0.0
    %112 = vmatpush1.msra.mxu0 0.0
    %113 = vmatprep.subr.mxu0 0.0
    %114 = vmatpush1.msra.mxu0 0.0
    %115 = vmatprep.subr.mxu0 0.0
    %116 = vmatpush1.msra.mxu0 0.0
    %117 = vmatprep.subr.mxu0 0.0
    %118 = vmatpush1.msra.mxu0 0.0
    %119 = vmatprep.subr.mxu0 0.0
    %120 = vmatpush1.msra.mxu0 0.0
    %121 = vmatprep.subr.mxu0 0.0
    %122 = vmatpush1.msra.mxu0 0.0
    %123 = vmatprep.subr.mxu0 0.0
    %124 = vmatpush1.msra.mxu0 0.0
    %125 = vmatprep.subr.mxu0 0.0
    %126 = vmatpush1.msra.mxu0 0.0
    %127 = vmatprep.subr.mxu0 0.0
    %128 = vmatpush1.msra.mxu0 0.0
    %129 = vmatprep.subr.mxu0 0.0
    %130 = vmatpush1.msra.mxu0 0.0
    %131 = vmatprep.subr.mxu0 0.0
    %132 = vmatpush1.msra.mxu0 0.0
    %133 = vmatprep.subr.mxu0 0.0
    %134 = vmatpush1.msra.mxu0 0.0
    %135 = vmatprep.mubr.f32.mxu0 0.0
    %136 = vmatmul.mubr.f32.gmra.mrb[0].mxu0 %v69
    %v137 = vpop.f32.mrb[0].mxu0
    %v138 = vadd.f32 %v65, %v137
    %v139 = vpop.f32.mrb[0].mxu0
    %140 = vdwg.mxu0
    %v141 = vmax.f32 %v138, 0.0
    %v142 = vld [vmem:[#allocation2] sm:$0xff]
    %v143 = vld [vmem:[#allocation2 + $0x8] sm:$0xff]
    %v144 = vld [vmem:[#allocation2 + $0x10] sm:$0xff]
    %v145 = vld [vmem:[#allocation2 + $0x18] sm:$0xff]
    %v146 = vld [vmem:[#allocation2 + $0x20] sm:$0xff]
    %v147 = vld [vmem:[#allocation2 + $0x28] sm:$0xff]
    %v148 = vld [vmem:[#allocation2 + $0x30] sm:$0xff]
    %v149 = vld [vmem:[#allocation2 + $0x38] sm:$0xff]
    %v150 = vld [vmem:[#allocation2 + $0x40] sm:$0xff]
    %v151 = vld [vmem:[#allocation2 + $0x48] sm:$0xff]
    %v152 = vld [vmem:[#allocation2 + $0x50] sm:$0xff]
    %v153 = vld [vmem:[#allocation2 + $0x58] sm:$0xff]
    %v154 = vld [vmem:[#allocation2 + $0x60] sm:$0xff]
    %v155 = vld [vmem:[#allocation2 + $0x68] sm:$0xff]
    %v156 = vld [vmem:[#allocation2 + $0x70] sm:$0xff]
    %v157 = vld [vmem:[#allocation2 + $0x78] sm:$0xff]
    %v158 = vld [vmem:[%s4] sm:$0x1]
    %v160 = vlaneseq
    %v161 = vshrl.u32 %v160, 7
    %v162 = vsub.s32 0, %v161
    %v163 = vrot.slane %v158, %v162
    %165 = vmatprep.subr.mxu0 0.0
    %166 = vmatpush1.msra.mxu0 %v142
    %167 = vmatprep.subr.mxu0 0.0
    %168 = vmatpush1.msra.mxu0 %v143
    %169 = vmatprep.subr.mxu0 0.0
    %170 = vmatpush1.msra.mxu0 %v144
    %171 = vmatprep.subr.mxu0 0.0
    %172 = vmatpush1.msra.mxu0 %v145
    %173 = vmatprep.subr.mxu0 0.0
    %174 = vmatpush1.msra.mxu0 %v146
    %175 = vmatprep.subr.mxu0 0.0
    %176 = vmatpush1.msra.mxu0 %v147
    %177 = vmatprep.subr.mxu0 0.0
    %178 = vmatpush1.msra.mxu0 %v148
    %179 = vmatprep.subr.mxu0 0.0
    %180 = vmatpush1.msra.mxu0 %v149
    %181 = vmatprep.subr.mxu0 0.0
    %182 = vmatpush1.msra.mxu0 %v150
    %183 = vmatprep.subr.mxu0 0.0
    %184 = vmatpush1.msra.mxu0 %v151
    %185 = vmatprep.subr.mxu0 0.0
    %186 = vmatpush1.msra.mxu0 %v152
    %187 = vmatprep.subr.mxu0 0.0
    %188 = vmatpush1.msra.mxu0 %v153
    %189 = vmatprep.subr.mxu0 0.0
    %190 = vmatpush1.msra.mxu0 %v154
    %191 = vmatprep.subr.mxu0 0.0
    %192 = vmatpush1.msra.mxu0 %v155
    %193 = vmatprep.subr.mxu0 0.0
    %194 = vmatpush1.msra.mxu0 %v156
    %195 = vmatprep.subr.mxu0 0.0
    %196 = vmatpush1.msra.mxu0 %v157
    %197 = vmatprep.subr.mxu0 0.0
    %198 = vmatpush1.msra.mxu0 0.0
    %199 = vmatprep.subr.mxu0 0.0
    %200 = vmatpush1.msra.mxu0 0.0
    %201 = vmatprep.subr.mxu0 0.0
    %202 = vmatpush1.msra.mxu0 0.0
    %203 = vmatprep.subr.mxu0 0.0
    %204 = vmatpush1.msra.mxu0 0.0
    %205 = vmatprep.subr.mxu0 0.0
    %206 = vmatpush1.msra.mxu0 0.0
    %207 = vmatprep.subr.mxu0 0.0
    %208 = vmatpush1.msra.mxu0 0.0
    %209 = vmatprep.subr.mxu0 0.0
    %210 = vmatpush1.msra.mxu0 0.0
    %211 = vmatprep.subr.mxu0 0.0
    %212 = vmatpush1.msra.mxu0 0.0
    %213 = vmatprep.subr.mxu0 0.0
    %214 = vmatpush1.msra.mxu0 0.0
    %215 = vmatprep.subr.mxu0 0.0
    %216 = vmatpush1.msra.mxu0 0.0
    %217 = vmatprep.subr.mxu0 0.0
    %218 = vmatpush1.msra.mxu0 0.0
    %219 = vmatprep.subr.mxu0 0.0
    %220 = vmatpush1.msra.mxu0 0.0
    %221 = vmatprep.subr.mxu0 0.0
    %222 = vmatpush1.msra.mxu0 0.0
    %223 = vmatprep.subr.mxu0 0.0
    %224 = vmatpush1.msra.mxu0 0.0
    %225 = vmatprep.subr.mxu0 0.0
    %226 = vmatpush1.msra.mxu0 0.0
    %227 = vmatprep.subr.mxu0 0.0
    %228 = vmatpush1.msra.mxu0 0.0
    %229 = vmatprep.mubr.f32.mxu0 0.0
    %230 = vmatmul.mubr.f32.gmra.mrb[0].mxu0 %v141
    %v231 = vpop.f32.mrb[0].mxu0
    %v232 = vadd.f32 %v163, %v231
    %v233 = vpop.f32.mrb[0].mxu0
    %234 = vdwg.mxu0
    %v235 = vmax.f32 %v232, 0.0
    %v236 = vld [vmem:[#allocation5] sm:$0xff]
    %v237 = vld [vmem:[#allocation5 + $0x8] sm:$0xff]
    %v238 = vld [vmem:[#allocation5 + $0x10] sm:$0xff]
    %v239 = vld [vmem:[#allocation5 + $0x18] sm:$0xff]
    %v240 = vld [vmem:[#allocation5 + $0x20] sm:$0xff]
    %v241 = vld [vmem:[#allocation5 + $0x28] sm:$0xff]
    %v242 = vld [vmem:[#allocation5 + $0x30] sm:$0xff]
    %v243 = vld [vmem:[#allocation5 + $0x38] sm:$0xff]
    %v244 = vld [vmem:[#allocation5 + $0x40] sm:$0xff]
    %v245 = vld [vmem:[#allocation5 + $0x48] sm:$0xff]
    %v246 = vld [vmem:[#allocation5 + $0x50] sm:$0xff]
    %v247 = vld [vmem:[#allocation5 + $0x58] sm:$0xff]
    %v248 = vld [vmem:[#allocation5 + $0x60] sm:$0xff]
    %v249 = vld [vmem:[#allocation5 + $0x68] sm:$0xff]
    %v250 = vld [vmem:[#allocation5 + $0x70] sm:$0xff]
    %v251 = vld [vmem:[#allocation5 + $0x78] sm:$0xff]
    %v252 = vld [vmem:[%s6] sm:$0x1]
    %v254 = vlaneseq
    %v255 = vshrl.u32 %v254, 7
    %v256 = vsub.s32 0, %v255
    %v257 = vrot.slane %v252, %v256
    %259 = vmatprep.subr.mxu0 0.0
    %260 = vmatpush1.msra.mxu0 %v236
    %261 = vmatprep.subr.mxu0 0.0
    %262 = vmatpush1.msra.mxu0 %v237
    %263 = vmatprep.subr.mxu0 0.0
    %264 = vmatpush1.msra.mxu0 %v238
    %265 = vmatprep.subr.mxu0 0.0
    %266 = vmatpush1.msra.mxu0 %v239
    %267 = vmatprep.subr.mxu0 0.0
    %268 = vmatpush1.msra.mxu0 %v240
    %269 = vmatprep.subr.mxu0 0.0
    %270 = vmatpush1.msra.mxu0 %v241
    %271 = vmatprep.subr.mxu0 0.0
    %272 = vmatpush1.msra.mxu0 %v242
    %273 = vmatprep.subr.mxu0 0.0
    %274 = vmatpush1.msra.mxu0 %v243
    %275 = vmatprep.subr.mxu0 0.0
    %276 = vmatpush1.msra.mxu0 %v244
    %277 = vmatprep.subr.mxu0 0.0
    %278 = vmatpush1.msra.mxu0 %v245
    %279 = vmatprep.subr.mxu0 0.0
    %280 = vmatpush1.msra.mxu0 %v246
    %281 = vmatprep.subr.mxu0 0.0
    %282 = vmatpush1.msra.mxu0 %v247
    %283 = vmatprep.subr.mxu0 0.0
    %284 = vmatpush1.msra.mxu0 %v248
    %285 = vmatprep.subr.mxu0 0.0
    %286 = vmatpush1.msra.mxu0 %v249
    %287 = vmatprep.subr.mxu0 0.0
    %288 = vmatpush1.msra.mxu0 %v250
    %289 = vmatprep.subr.mxu0 0.0
    %290 = vmatpush1.msra.mxu0 %v251
    %291 = vmatprep.subr.mxu0 0.0
    %292 = vmatpush1.msra.mxu0 0.0
    %293 = vmatprep.subr.mxu0 0.0
    %294 = vmatpush1.msra.mxu0 0.0
    %295 = vmatprep.subr.mxu0 0.0
    %296 = vmatpush1.msra.mxu0 0.0
    %297 = vmatprep.subr.mxu0 0.0
    %298 = vmatpush1.msra.mxu0 0.0
    %299 = vmatprep.subr.mxu0 0.0
    %300 = vmatpush1.msra.mxu0 0.0
    %301 = vmatprep.subr.mxu0 0.0
    %302 = vmatpush1.msra.mxu0 0.0
    %303 = vmatprep.subr.mxu0 0.0
    %304 = vmatpush1.msra.mxu0 0.0
    %305 = vmatprep.subr.mxu0 0.0
    %306 = vmatpush1.msra.mxu0 0.0
    %307 = vmatprep.subr.mxu0 0.0
    %308 = vmatpush1.msra.mxu0 0.0
    %309 = vmatprep.subr.mxu0 0.0
    %310 = vmatpush1.msra.mxu0 0.0
    %311 = vmatprep.subr.mxu0 0.0
    %312 = vmatpush1.msra.mxu0 0.0
    %313 = vmatprep.subr.mxu0 0.0
    %314 = vmatpush1.msra.mxu0 0.0
    %315 = vmatprep.subr.mxu0 0.0
    %316 = vmatpush1.msra.mxu0 0.0
    %317 = vmatprep.subr.mxu0 0.0
    %318 = vmatpush1.msra.mxu0 0.0
    %319 = vmatprep.subr.mxu0 0.0
    %320 = vmatpush1.msra.mxu0 0.0
    %321 = vmatprep.subr.mxu0 0.0
    %322 = vmatpush1.msra.mxu0 0.0
    %323 = vmatprep.mubr.f32.mxu0 0.0
    %324 = vmatmul.mubr.f32.gmra.mrb[0].mxu0 %v235
    %v325 = vpop.f32.mrb[0].mxu0
    %v326 = vadd.f32 %v257, %v325
    %v327 = vpop.f32.mrb[0].mxu0
    %328 = vdwg.mxu0
    %329 = vst [vmem:[#allocation7] sm:$0xff] %v326
    // Predicated region
    $region38: #{fused_mlp_forward.1} parent=1 // pred_check
      _
    $region39: #{fused_mlp_forward.1} parent=1 // pred_check_branch
      %331 = sbr.rel (0) target = $region41
    $region40: #{fused_mlp_forward.1} parent=1 // pred_region
      %s333 = ssub.s32 128, 128
      %334 = vsyncadd [#allocation4], %s333
      %s336 = sshll.u32 [#allocation7], 4
      %s337 = int_to_ptr.vmem [resolvable:$true] %s336
      %339 = dma.vmem_to_hbm [thread:$0]  %s337, 128, %s7, [#allocation4]
    $region41: #{fused_mlp_forward.1} parent=1 // pred_fallthru
      _
    // Predicated region
    $region42: #{fused_mlp_forward.1} parent=1 // pred_check
      _
    $region43: #{fused_mlp_forward.1} parent=1 // pred_check_branch
      %341 = sbr.rel (0) target = $region45
    $region44: #{fused_mlp_forward.1} parent=1 // pred_region
      %342 = dma.done [#allocation4], 128
    $region45: #{fused_mlp_forward.1} parent=1 // pred_fallthru
      _
    %343 = vsyncpa [#allocation3], 1
    %344 = vsyncpa [#allocation6], 1
    %345 = vsyncpa [#allocation4], 1

</llo_original>
